<compile_context>
chip_gen: v7x
topology: tpu7x:2x2x1
jax: 0.10.0
libtpu: 0.0.40
codegen_flags: <defaults>
</compile_context>

<pallas_src>
import functools

import jax
import jax.numpy as jnp
from jax.experimental import pallas as pl
from jax.experimental.pallas import tpu as pltpu

_LANE = 128


def _round_up(n, m):
    return ((n + m - 1) // m) * m


def moe_kernel(x_ref, w_ref, b_ref, o_ref):
    """One grid step: (batch b, spatial tile s).

    x_ref : VMEM (1, C, ts)  channels-first input tile (x.dtype)
    w_ref : VMEM (1, C, C)   per-batch DELTA weight (C_out, C_in) = k*sum_e exp_w[b,e]*W_e^T
    b_ref : VMEM (1, C, 1)   per-batch delta bias (f32)
    o_ref : VMEM (1, C, ts)  output tile (lane-dense along ts)

    out = x + W_delta @ x + b_delta.  Residual added on the VPU (not folded
    into the MXU) so the x pass-through term keeps full precision.
    """
    x = x_ref[0]                      # (C_in, ts)
    w = w_ref[0]                      # (C_out, C_in)
    bias = b_ref[0]                   # (C_out, 1) f32, broadcasts over lanes
    y = jnp.dot(w, x, preferred_element_type=jnp.float32)    # MXU, f32 accum
    o_ref[0] = (x.astype(jnp.float32) + y + bias).astype(o_ref.dtype)


@functools.partial(jax.jit, static_argnames=("num_expert",))
def moe_layer3d_forward(x_ncdhw, gate_w, gate_b, expert_w, expert_b, k,
                        num_expert=2):
    B, C, D, H, W = x_ncdhw.shape
    S = D * H * W
    dtype = x_ncdhw.dtype
    itemsize = jnp.dtype(dtype).itemsize

    # Channels-first flattened layout (B, C, S): pure reshape, no transpose;
    # the spatial axis lands on the lane dimension -> lane-dense loads/stores.
    x = x_ncdhw.reshape(B, C, S)

    # --- gate: GAP over spatial + Linear(C->E), softmax, top-k scatter.
    # Tiny per-batch glue kept in plain JAX.
    # TODO(synk): the GAP is an extra full HBM read of x (~1/3 of end-to-end
    # traffic); a fused variant keeping a per-batch (C,S) slab resident in
    # VMEM would remove it when it fits, but needs in-kernel softmax/top-k.
    pooled = jnp.mean(x, axis=2)                                     # (B, C)
    logits = pooled @ gate_w + gate_b                                # (B, E)
    weights = jax.nn.softmax(logits.astype(jnp.float32), axis=1)     # fp32 softmax
    weights = weights.astype(dtype)                                  # .to(inputs.dtype)
    topk_w, topk_idx = jax.lax.top_k(weights, num_expert)
    exp_w = jnp.zeros_like(weights).at[
        jnp.arange(B)[:, None], topk_idx].set(topk_w)                # (B, E)

    # --- fold the (linear) experts + gate scale + k into ONE per-batch delta
    # weight/bias.  Residual is NOT folded (added explicitly in the kernel).
    scale = exp_w.astype(jnp.float32) * jnp.asarray(k, jnp.float32)  # (B, E)
    w_delta = jnp.einsum("be,eio->boi", scale,
                         expert_w.astype(jnp.float32))               # (B, Cout, Cin)
    w_delta = w_delta.astype(dtype)          # match x dtype -> native MXU path
    b_delta = jnp.einsum("be,eo->bo", scale,
                         expert_b.astype(jnp.float32)).reshape(B, C, 1)  # f32

    # --- lane-align the spatial extent (pad + slice instead of a whole-extent
    # fallback block for ragged S).
    S_pad = _round_up(S, _LANE)
    x_k = x if S_pad == S else jnp.pad(x, ((0, 0), (0, 0), (0, S_pad - S)))

    # --- spatial tile: largest multiple of 128 such that the double-buffered
    # pipeline (in + out tiles, f32 temp, resident W/bias) fits a budget that
    # is safe on every generation's scoped-VMEM window.
    budget = 24 * 1024 * 1024
    fixed = 2 * (C * C * itemsize + C * 4)            # resident W_delta + bias (2 bufs)
    per_col = C * (2 * itemsize + 2 * itemsize + 4)   # dbl-buffered in+out + f32 temp
    ts = max(_LANE, ((budget - fixed) // per_col) // _LANE * _LANE)
    ts = min(ts, S_pad)
    # v7x has 2 TensorCores: guarantee >= 2 independent parallel grid units.
    if B * pl.cdiv(S_pad, ts) < 2 and S_pad >= 2 * _LANE:
        ts = _round_up(pl.cdiv(S_pad, 2), _LANE)
    grid_s = pl.cdiv(S_pad, ts)

    vmem_limit = int(max(fixed + per_col * ts + 4 * 1024 * 1024,
                         8 * 1024 * 1024))

    # Alias input->output only when we created a padded temp; aliasing the
    # original (non-donated) jit argument would force a defensive HBM copy.
    io_alias = {0: 0} if S_pad != S else {}

    out = pl.pallas_call(
        moe_kernel,
        out_shape=jax.ShapeDtypeStruct((B, C, S_pad), dtype),
        grid_spec=pltpu.PrefetchScalarGridSpec(
            num_scalar_prefetch=0,
            grid=(B, grid_s),
            in_specs=[
                pl.BlockSpec((1, C, ts), lambda b, s: (b, 0, s)),   # x tile
                pl.BlockSpec((1, C, C), lambda b, s: (b, 0, 0)),    # W_delta[b]
                pl.BlockSpec((1, C, 1), lambda b, s: (b, 0, 0)),    # b_delta[b]
            ],
            out_specs=pl.BlockSpec((1, C, ts), lambda b, s: (b, 0, s)),
        ),
        compiler_params=pltpu.CompilerParams(
            dimension_semantics=("parallel", "parallel"),
            vmem_limit_bytes=vmem_limit),
        input_output_aliases=io_alias,
    )(x_k, w_delta, b_delta)

    if S_pad != S:
        out = out[:, :, :S]
    return out.reshape(B, C, D, H, W)


def moe_layer3d_reference(x, gate_w, gate_b, expert_w, expert_b, k, num_expert=2):
    """Pure-JAX reference mirroring the PyTorch training-branch forward."""
    B, C, D, H, W = x.shape
    E = expert_w.shape[0]
    pooled = jnp.mean(x, axis=(2, 3, 4))                            # (B, C)
    logits = pooled @ gate_w + gate_b                               # (B, E)
    weights = jax.nn.softmax(logits.astype(jnp.float32), axis=1).astype(x.dtype)
    topk_w, topk_idx = jax.lax.top_k(weights, num_expert)
    exp_w = jnp.zeros_like(weights).at[
        jnp.arange(B)[:, None], topk_idx].set(topk_w)
    out = x
    for i in range(E):
        y = jnp.einsum("bcdhw,co->bodhw", x, expert_w[i])
        y = y + expert_b[i][None, :, None, None, None]
        y = y * k                                                   # expert_i(x, k)
        out = out + y * exp_w[:, i][:, None, None, None, None]
    return out


if __name__ == "__main__":
    # Small, deterministic setup.
    B, C, D, H, W = 2, 16, 8, 8, 8       # S = D*H*W = 512 (lane-aligned)
    E, NUM_EXPERT = 4, 2
    K_SCALAR = 0.7

    key = jax.random.PRNGKey(0)
    kx, kgw, kgb, kew, keb, kx2 = jax.random.split(key, 6)
    x = jax.random.normal(kx, (B, C, D, H, W), dtype=jnp.float32)
    gate_w = 0.1 * jax.random.normal(kgw, (C, E), dtype=jnp.float32)
    gate_b = 0.1 * jax.random.normal(kgb, (E,), dtype=jnp.float32)
    expert_w = 0.1 * jax.random.normal(kew, (E, C, C), dtype=jnp.float32)
    expert_b = 0.1 * jax.random.normal(keb, (E, C), dtype=jnp.float32)

    out = moe_layer3d_forward(x, gate_w, gate_b, expert_w, expert_b,
                              K_SCALAR, num_expert=NUM_EXPERT)
    out = jax.block_until_ready(out)
    ref = moe_layer3d_reference(x, gate_w, gate_b, expert_w, expert_b,
                                K_SCALAR, num_expert=NUM_EXPERT)
    assert out.shape == (B, C, D, H, W), out.shape
    assert jnp.allclose(out, ref, rtol=1e-4, atol=1e-4), float(
        jnp.max(jnp.abs(out - ref)))

    # Ragged-spatial path (S = 125 -> padded to 128, input aliased to output).
    x2 = jax.random.normal(kx2, (B, C, 5, 5, 5), dtype=jnp.float32)
    out2 = jax.block_until_ready(
        moe_layer3d_forward(x2, gate_w, gate_b, expert_w, expert_b,
                            K_SCALAR, num_expert=NUM_EXPERT))
    ref2 = moe_layer3d_reference(x2, gate_w, gate_b, expert_w, expert_b,
                                 K_SCALAR, num_expert=NUM_EXPERT)
    assert out2.shape == x2.shape, out2.shape
    assert jnp.allclose(out2, ref2, rtol=1e-4, atol=1e-4), float(
        jnp.max(jnp.abs(out2 - ref2)))

    print("KERNEL_OK")
</pallas_src>

<mosaic_0001>
module attributes {stable_mosaic.version = 11 : i64} {
  func.func @moe_kernel(%arg0: i32, %arg1: i32, %arg2: memref<1x16x512xf32, #tpu.memory_space<vmem>>, %arg3: memref<1x16x16xf32, #tpu.memory_space<vmem>>, %arg4: memref<1x16x1xf32, #tpu.memory_space<vmem>>, %arg5: memref<1x16x512xf32, #tpu.memory_space<vmem>>) attributes {dimension_semantics = [#tpu.dimension_semantics<parallel>, #tpu.dimension_semantics<parallel>], iteration_bounds = array<i64: 2, 1>, scalar_prefetch = 0 : i64, scratch_operands = 0 : i64, tpu.core_type = #tpu.core_type<tc>, window_params = [{transform_indices = @transform_0, window_bounds = array<i64: 1, 16, 512>}, {transform_indices = @transform_1, window_bounds = array<i64: 1, 16, 16>}, {transform_indices = @transform_2, window_bounds = array<i64: 1, 16, 1>}, {transform_indices = @transform_3, window_bounds = array<i64: 1, 16, 512>}]} {
    %c0 = arith.constant 0 : index
    %c0_0 = arith.constant 0 : index
    %c0_1 = arith.constant 0 : index
    %0 = vector.load %arg2[%c0, %c0_0, %c0_1] : memref<1x16x512xf32, #tpu.memory_space<vmem>>, vector<1x16x512xf32>
    %1 = vector.shape_cast %0 : vector<1x16x512xf32> to vector<16x512xf32>
    %c0_2 = arith.constant 0 : index
    %c0_3 = arith.constant 0 : index
    %c0_4 = arith.constant 0 : index
    %2 = vector.load %arg3[%c0_2, %c0_3, %c0_4] : memref<1x16x16xf32, #tpu.memory_space<vmem>>, vector<1x16x16xf32>
    %3 = vector.shape_cast %2 : vector<1x16x16xf32> to vector<16x16xf32>
    %c0_5 = arith.constant 0 : index
    %c0_6 = arith.constant 0 : index
    %c0_7 = arith.constant 0 : index
    %4 = vector.load %arg4[%c0_5, %c0_6, %c0_7] : memref<1x16x1xf32, #tpu.memory_space<vmem>>, vector<1x16x1xf32>
    %5 = vector.shape_cast %4 : vector<1x16x1xf32> to vector<16x1xf32>
    %cst = arith.constant dense<0.000000e+00> : vector<16x512xf32>
    %6 = tpu.matmul %3, %1, %cst {dimension_numbers = #tpu.dot_dimension_numbers<[1], [0], [0], [1], [0, 0, 1, 1], [], []>} : vector<16x16xf32>, vector<16x512xf32>, vector<16x512xf32> -> vector<16x512xf32>
    %7 = arith.addf %1, %6 : vector<16x512xf32>
    %8 = vector.broadcast %5 : vector<16x1xf32> to vector<16x512xf32>
    %9 = arith.addf %7, %8 : vector<16x512xf32>
    %c0_8 = arith.constant 0 : index
    %c0_9 = arith.constant 0 : index
    %c0_10 = arith.constant 0 : index
    %10 = vector.load %arg5[%c0_8, %c0_9, %c0_10] : memref<1x16x512xf32, #tpu.memory_space<vmem>>, vector<1x16x512xf32>
    %11 = vector.shape_cast %10 : vector<1x16x512xf32> to vector<16x512xf32>
    %12 = vector.shape_cast %9 : vector<16x512xf32> to vector<1x16x512xf32>
    tpu.vector_store %arg5[%c0_8, %c0_9, %c0_10], %12 {strides = array<i32>} : memref<1x16x512xf32, #tpu.memory_space<vmem>>, vector<1x16x512xf32>,
    return
  }
  func.func @transform_0(%arg0: i32, %arg1: i32) -> (i32, i32, i32) {
    %c0_i32 = arith.constant 0 : i32
    %c0_i32_0 = arith.constant 0 : i32
    return %arg0, %c0_i32, %arg1 : i32, i32, i32
  }
  func.func @transform_1(%arg0: i32, %arg1: i32) -> (i32, i32, i32) {
    %c0_i32 = arith.constant 0 : i32
    %c0_i32_0 = arith.constant 0 : i32
    %c0_i32_1 = arith.constant 0 : i32
    return %arg0, %c0_i32, %c0_i32_0 : i32, i32, i32
  }
  func.func @transform_2(%arg0: i32, %arg1: i32) -> (i32, i32, i32) {
    %c0_i32 = arith.constant 0 : i32
    %c0_i32_0 = arith.constant 0 : i32
    %c0_i32_1 = arith.constant 0 : i32
    return %arg0, %c0_i32, %c0_i32_0 : i32, i32, i32
  }
  func.func @transform_3(%arg0: i32, %arg1: i32) -> (i32, i32, i32) {
    %c0_i32 = arith.constant 0 : i32
    %c0_i32_0 = arith.constant 0 : i32
    return %arg0, %c0_i32, %arg1 : i32, i32, i32
  }
}

</mosaic_0001>

<llo_original>
// kernel: moe_layer3d_forward.1
$region0: #{moe_layer3d_forward.1}
  #allocation0 [shape = 'u32[]', space=smem, size = 0x4, offset = 0x4, fixed_abs, tag = 'smem constant byte address 0x4 - core index']
  #allocation1 [shape = 'u32[144,128]{1,0:T(1,128)}', space=vmem, size = 0x12000, scoped, tag = 'internal scratch']
  %s0 = inlined_call_operand.vmem [shape: f32[2,16,512], index: 0, kind: input, shape index: {}]
  %s1 = inlined_call_operand.vmem [shape: f32[2,16,16], index: 1, kind: input, shape index: {}]
  %s2 = inlined_call_operand.vmem [shape: f32[2,16,1], index: 2, kind: input, shape index: {}]
  %s3 = inlined_call_operand.vmem [shape: f32[2,16,512], index: 3, kind: output, shape index: {}]
  %s4 = sld [smem:[#allocation0]]
  $region45: #{moe_layer3d_forward.1} parent=0
    _
  %s6 = ssub.s32 1, %s4
  %s7 = scalar_select 0, %s6, %s4
  loop: start=0, step=1, limit=4
  $region2: #{moe_layer3d_forward.1} parent=0 // loop_pre_header
    _
  $region3: #{moe_layer3d_forward.1} parent=0 // loop_header
    %s9 = sphi 0, %s13
    %p10 = scmp.ge.s32.totalorder %s9, 4
    %s16 = sphi 0, %s28
    %s17 = sphi 0, %s24
    %s18 = sphi 0, %s16
    %s19 = sphi 0, %s17
    %s20 = sphi 0, %s18
    %s21 = sphi 0, %s19
    %s33 = sphi 0, %s35
    %s36 = sphi 0, %s33
    %s37 = sphi 0, %s36
    %s53 = sphi 0, %s37
    %s59 = sphi 0, %s61
    %s62 = sphi 0, %s59
    %s63 = sphi 0, %s62
    %s79 = sphi 0, %s63
    %s85 = sphi 0, %s87
    %s88 = sphi 0, %s85
    %s89 = sphi 0, %s88
    %s105 = sphi 0, %s89
    %s113 = sphi 0, %s115
    %s116 = sphi 0, %s113
    %s117 = sphi 0, %s116
    %s133 = sphi 0, %s117
  $region4: #{moe_layer3d_forward.1} parent=0 // loop_header_branch
    %12 = sbr.rel (%p10) target = $region8
  $region5: #{moe_layer3d_forward.1} parent=0 // loop_body
    %s14 = ssub.s32 %s9, 1
    %s15 = ssub.s32 %s9, 2
    %s22 = sadd.s32 1, %s17
    %p23 = scmp.ge.s32.totalorder %s22, 1
    %s24 = scalar_select %p23, 0, %s22
    %s25 = sadd.s32 1, %s16
    %s26 = scalar_select %p23, %s25, %s16
    %p27 = scmp.ge.s32.totalorder %s26, 2
    %s28 = scalar_select %p27, 0, %s26
    %s29 = ssub.s32 %s16, %s28
    %s30 = ssub.s32 %s17, %s24
    %s31 = sor.u32 %s29, %s30
    %p32 = scmp.eq.s32.totalorder %s31, 0
    %s34 = sadd.s32 %s33, 1
    %s35 = scalar_select %p32, %s33, %s34
    %p38 = pneg %p32
    %p39 = scmp.eq.s32.totalorder %s9, 1
    %p40 = por %p38, %p39
    %p41 = scmp.ne.s32.totalorder %s33, %s36
    %p42 = scmp.eq.s32.totalorder %s9, 0
    %p43 = por %p41, %p42
    %p44 = scmp.ne.s32.totalorder %s33, %s36
    %p45 = scmp.eq.s32.totalorder %s14, 1
    %p46 = por %p44, %p45
    %p47 = scmp.ne.s32.totalorder %s36, %s37
    %p48 = scmp.eq.s32.totalorder %s14, 0
    %p49 = por %p47, %p48
    %p50 = scmp.ne.s32.totalorder %s36, %s37
    %p51 = scmp.eq.s32.totalorder %s15, 1
    %p52 = por %p50, %p51
    %p54 = scmp.ne.s32.totalorder %s37, %s53
    %p55 = scmp.eq.s32.totalorder %s15, 0
    %p56 = por %p54, %p55
    %s57 = ssub.s32 %s16, %s28
    %p58 = scmp.eq.s32.totalorder %s57, 0
    %s60 = sadd.s32 %s59, 1
    %s61 = scalar_select %p58, %s59, %s60
    %p64 = pneg %p58
    %p65 = scmp.eq.s32.totalorder %s9, 1
    %p66 = por %p64, %p65
    %p67 = scmp.ne.s32.totalorder %s59, %s62
    %p68 = scmp.eq.s32.totalorder %s9, 0
    %p69 = por %p67, %p68
    %p70 = scmp.ne.s32.totalorder %s59, %s62
    %p71 = scmp.eq.s32.totalorder %s14, 1
    %p72 = por %p70, %p71
    %p73 = scmp.ne.s32.totalorder %s62, %s63
    %p74 = scmp.eq.s32.totalorder %s14, 0
    %p75 = por %p73, %p74
    %p76 = scmp.ne.s32.totalorder %s62, %s63
    %p77 = scmp.eq.s32.totalorder %s15, 1
    %p78 = por %p76, %p77
    %p80 = scmp.ne.s32.totalorder %s63, %s79
    %p81 = scmp.eq.s32.totalorder %s15, 0
    %p82 = por %p80, %p81
    %s83 = ssub.s32 %s16, %s28
    %p84 = scmp.eq.s32.totalorder %s83, 0
    %s86 = sadd.s32 %s85, 1
    %s87 = scalar_select %p84, %s85, %s86
    %p90 = pneg %p84
    %p91 = scmp.eq.s32.totalorder %s9, 1
    %p92 = por %p90, %p91
    %p93 = scmp.ne.s32.totalorder %s85, %s88
    %p94 = scmp.eq.s32.totalorder %s9, 0
    %p95 = por %p93, %p94
    %p96 = scmp.ne.s32.totalorder %s85, %s88
    %p97 = scmp.eq.s32.totalorder %s14, 1
    %p98 = por %p96, %p97
    %p99 = scmp.ne.s32.totalorder %s88, %s89
    %p100 = scmp.eq.s32.totalorder %s14, 0
    %p101 = por %p99, %p100
    %p102 = scmp.ne.s32.totalorder %s88, %s89
    %p103 = scmp.eq.s32.totalorder %s15, 1
    %p104 = por %p102, %p103
    %p106 = scmp.ne.s32.totalorder %s89, %s105
    %p107 = scmp.eq.s32.totalorder %s15, 0
    %p108 = por %p106, %p107
    %s109 = ssub.s32 %s16, %s28
    %s110 = ssub.s32 %s17, %s24
    %s111 = sor.u32 %s109, %s110
    %p112 = scmp.eq.s32.totalorder %s111, 0
    %s114 = sadd.s32 %s113, 1
    %s115 = scalar_select %p112, %s113, %s114
    %p118 = pneg %p112
    %p119 = scmp.eq.s32.totalorder %s9, 1
    %p120 = por %p118, %p119
    %p121 = scmp.ne.s32.totalorder %s113, %s116
    %p122 = scmp.eq.s32.totalorder %s9, 0
    %p123 = por %p121, %p122
    %p124 = scmp.ne.s32.totalorder %s113, %s116
    %p125 = scmp.eq.s32.totalorder %s14, 1
    %p126 = por %p124, %p125
    %p127 = scmp.ne.s32.totalorder %s116, %s117
    %p128 = scmp.eq.s32.totalorder %s14, 0
    %p129 = por %p127, %p128
    %p130 = scmp.ne.s32.totalorder %s116, %s117
    %p131 = scmp.eq.s32.totalorder %s15, 1
    %p132 = por %p130, %p131
    %p134 = scmp.ne.s32.totalorder %s117, %s133
    %p135 = scmp.eq.s32.totalorder %s15, 0
    %p136 = por %p134, %p135
    %p137 = scmp.le.s32.totalorder 1, %s9
    %p138 = scmp.lt.s32.totalorder %s9, 3
    %p139 = pnand %p137, %p138
    %p140 = pneg %p139
    // Predicated region
    $region9: #{moe_layer3d_forward.1} parent=5 // pred_check
      _
    $region10: #{moe_layer3d_forward.1} parent=5 // pred_check_branch
      %142 = sbr.rel (%p139) target = $region12
    $region11: #{moe_layer3d_forward.1} parent=5 // pred_region
      %s143 = ssub.s32 %s9, 1
    $region12: #{moe_layer3d_forward.1} parent=5 // pred_fallthru
      _
    %p144 = scmp.lt.s32.totalorder %s9, 2
    // Predicated region
    $region13: #{moe_layer3d_forward.1} parent=5 // pred_check
      %p145 = pneg %p144
    $region14: #{moe_layer3d_forward.1} parent=5 // pred_check_branch
      %147 = sbr.rel (%p145) target = $region16
    $region15: #{moe_layer3d_forward.1} parent=5 // pred_region
      // Predicated region
      $region17: #{moe_layer3d_forward.1} parent=15 // pred_check
        %p148 = pneg %p43
      $region18: #{moe_layer3d_forward.1} parent=15 // pred_check_branch
        %150 = sbr.rel (%p148) target = $region20
      $region19: #{moe_layer3d_forward.1} parent=15 // pred_region
        %s151 = smul.u32 4, %s17
        %p152 = scmp.lt.s32.totalorder %s16, 1
        %s153 = scalar_select %p152, %s16, 1
        %p154 = scmp.lt.s32.totalorder %s151, 3
        %s155 = scalar_select %p154, %s151, 3
        %s156 = smul.addr %s153, 8
        %s157 = sadd.s32 %s155, %s156
        %s158 = smul.addr %s157, 8
        %s159 = scalar_lea.vmem %s0, %s158
        %s160 = smul.u32 4, %s17
      $region20: #{moe_layer3d_forward.1} parent=15 // pred_fallthru
        _
      // Predicated region
      $region21: #{moe_layer3d_forward.1} parent=15 // pred_check
        %p161 = pneg %p69
      $region22: #{moe_layer3d_forward.1} parent=15 // pred_check_branch
        %163 = sbr.rel (%p161) target = $region24
      $region23: #{moe_layer3d_forward.1} parent=15 // pred_region
        %p164 = scmp.lt.s32.totalorder %s16, 1
        %s165 = scalar_select %p164, %s16, 1
        %s166 = smul.addr %s165, 2
        %s167 = smul.addr %s166, 8
        %s168 = scalar_lea.vmem %s1, %s167
      $region24: #{moe_layer3d_forward.1} parent=15 // pred_fallthru
        _
      // Predicated region
      $region25: #{moe_layer3d_forward.1} parent=15 // pred_check
        %p169 = pneg %p95
      $region26: #{moe_layer3d_forward.1} parent=15 // pred_check_branch
        %171 = sbr.rel (%p169) target = $region28
      $region27: #{moe_layer3d_forward.1} parent=15 // pred_region
        %p172 = scmp.lt.s32.totalorder %s16, 1
        %s173 = scalar_select %p172, %s16, 1
        %s174 = smul.addr %s173, 2
        %s175 = smul.addr %s174, 8
        %s176 = scalar_lea.vmem %s2, %s175
      $region28: #{moe_layer3d_forward.1} parent=15 // pred_fallthru
        _
    $region16: #{moe_layer3d_forward.1} parent=5 // pred_fallthru
      _
    %p177 = scmp.le.s32.totalorder 1, %s9
    %p178 = scmp.lt.s32.totalorder %s9, 3
    %p179 = pnand %p177, %p178
    %p180 = pneg %p179
    // Predicated region
    $region29: #{moe_layer3d_forward.1} parent=5 // pred_check
      _
    $region30: #{moe_layer3d_forward.1} parent=5 // pred_check_branch
      %182 = sbr.rel (%p179) target = $region32
    $region31: #{moe_layer3d_forward.1} parent=5 // pred_region
      %s183 = ssub.s32 %s9, 1
      %s184 = smul.u32 4, %s19
      %p185 = scmp.lt.s32.totalorder %s18, 1
      %s186 = scalar_select %p185, %s18, 1
      %p187 = scmp.lt.s32.totalorder %s184, 3
      %s188 = scalar_select %p187, %s184, 3
      %s189 = smul.addr %s186, 8
      %s190 = sadd.s32 %s188, %s189
      %s191 = smul.addr %s190, 8
      %s192 = scalar_lea.vmem %s0, %s191
      %p193 = pneg %p49
      %p194 = pneg %p46
      %p195 = scmp.lt.s32.totalorder %s18, 1
      %s196 = scalar_select %p195, %s18, 1
      %s197 = smul.addr %s196, 2
      %s198 = smul.addr %s197, 8
      %s199 = scalar_lea.vmem %s1, %s198
      %p200 = pneg %p75
      %p201 = pneg %p72
      %p202 = scmp.lt.s32.totalorder %s18, 1
      %s203 = scalar_select %p202, %s18, 1
      %s204 = smul.addr %s203, 2
      %s205 = smul.addr %s204, 8
      %s206 = scalar_lea.vmem %s2, %s205
      %p207 = pneg %p101
      %p208 = pneg %p98
      %p209 = pneg %p129
      %p210 = pneg %p126
      %s211 = smul.u32 4, %s19
      %p212 = scmp.lt.s32.totalorder %s18, 1
      %s213 = scalar_select %p212, %s18, 1
      %p214 = scmp.lt.s32.totalorder %s211, 3
      %s215 = scalar_select %p214, %s211, 3
      %s216 = smul.addr %s213, 8
      %s217 = sadd.s32 %s215, %s216
      %s218 = smul.addr %s217, 8
      %s219 = scalar_lea.vmem %s3, %s218
      %s220 = smul.u32 4, %s19
      %p221 = scmp.lt.s32.totalorder %s18, 1
      %s222 = scalar_select %p221, %s18, 1
      %p223 = scmp.lt.s32.totalorder %s220, 3
      %s224 = scalar_select %p223, %s220, 3
      %s225 = smul.addr %s222, 8
      %s226 = sadd.s32 %s224, %s225
      %s227 = smul.addr %s226, 8
      %s228 = scalar_lea.vmem %s0, %s227
      %s229 = smul.u32 4, %s19
      %p230 = scmp.lt.s32.totalorder %s18, 1
      %s231 = scalar_select %p230, %s18, 1
      %s232 = smul.addr %s231, 2
      %s233 = smul.addr %s232, 8
      %s234 = scalar_lea.vmem %s1, %s233
      %p235 = scmp.lt.s32.totalorder %s18, 1
      %s236 = scalar_select %p235, %s18, 1
      %s237 = smul.addr %s236, 2
      %s238 = smul.addr %s237, 8
      %s239 = scalar_lea.vmem %s2, %s238
      %s240 = smul.u32 4, %s19
      %p241 = scmp.lt.s32.totalorder %s18, 1
      %s242 = scalar_select %p241, %s18, 1
      %p243 = scmp.lt.s32.totalorder %s240, 3
      %s244 = scalar_select %p243, %s240, 3
      %s245 = smul.addr %s242, 8
      %s246 = sadd.s32 %s244, %s245
      %s247 = smul.addr %s246, 8
      %s248 = scalar_lea.vmem %s3, %s247
      %s249 = smul.u32 4, %s19
      %v250 = vld [vmem:[%s228] sm:$0xff]
      %v251 = vld [vmem:[%s228 + $0x8] sm:$0xff]
      %v252 = vld [vmem:[%s228 + $0x10] sm:$0xff]
      %v253 = vld [vmem:[%s228 + $0x18] sm:$0xff]
      %v254 = vld [vmem:[%s228 + $0x20] sm:$0xff]
      %v255 = vld [vmem:[%s228 + $0x28] sm:$0xff]
      %v256 = vld [vmem:[%s228 + $0x30] sm:$0xff]
      %v257 = vld [vmem:[%s228 + $0x38] sm:$0xff]
      %v258 = vld [vmem:[%s234] sm:$0xff]
      %v259 = vld [vmem:[%s234 + $0x8] sm:$0xff]
      %v260 = vld [vmem:[%s239] sm:$0xff]
      %v261 = vld [vmem:[%s239 + $0x8] sm:$0xff]
      %vm262 = vcmask 130048
      %v264 = vsel %vm262, %v258, 0
      %v267 = vsel %vm262, %v259, 0
      %269 = vmatprep.subr.mxu0 %v251
      %270 = vmatpush1.msra.mxu0 %v250
      %271 = vmatprep.subr.mxu0 %v255
      %272 = vmatpush1.msra.mxu0 %v254
      %273 = vmatprep.subr.mxu0 0.0
      %274 = vmatpush1.msra.mxu0 0.0
      %275 = vmatprep.subr.mxu0 0.0
      %276 = vmatpush1.msra.mxu0 0.0
      %277 = vmatprep.subr.mxu0 0.0
      %278 = vmatpush1.msra.mxu0 0.0
      %279 = vmatprep.subr.mxu0 0.0
      %280 = vmatpush1.msra.mxu0 0.0
      %281 = vmatprep.subr.mxu0 0.0
      %282 = vmatpush1.msra.mxu0 0.0
      %283 = vmatprep.subr.mxu0 0.0
      %284 = vmatpush1.msra.mxu0 0.0
      %285 = vmatprep.subr.mxu0 0.0
      %286 = vmatpush1.msra.mxu0 0.0
      %287 = vmatprep.subr.mxu0 0.0
      %288 = vmatpush1.msra.mxu0 0.0
      %289 = vmatprep.subr.mxu0 0.0
      %290 = vmatpush1.msra.mxu0 0.0
      %291 = vmatprep.subr.mxu0 0.0
      %292 = vmatpush1.msra.mxu0 0.0
      %293 = vmatprep.subr.mxu0 0.0
      %294 = vmatpush1.msra.mxu0 0.0
      %295 = vmatprep.subr.mxu0 0.0
      %296 = vmatpush1.msra.mxu0 0.0
      %297 = vmatprep.subr.mxu0 0.0
      %298 = vmatpush1.msra.mxu0 0.0
      %299 = vmatprep.subr.mxu0 0.0
      %300 = vmatpush1.msra.mxu0 0.0
      %301 = vmatprep.subr.mxu0 0.0
      %302 = vmatpush1.msra.mxu0 0.0
      %303 = vmatprep.subr.mxu0 0.0
      %304 = vmatpush1.msra.mxu0 0.0
      %305 = vmatprep.subr.mxu0 0.0
      %306 = vmatpush1.msra.mxu0 0.0
      %307 = vmatprep.subr.mxu0 0.0
      %308 = vmatpush1.msra.mxu0 0.0
      %309 = vmatprep.subr.mxu0 0.0
      %310 = vmatpush1.msra.mxu0 0.0
      %311 = vmatprep.subr.mxu0 0.0
      %312 = vmatpush1.msra.mxu0 0.0
      %313 = vmatprep.subr.mxu0 0.0
      %314 = vmatpush1.msra.mxu0 0.0
      %315 = vmatprep.subr.mxu0 0.0
      %316 = vmatpush1.msra.mxu0 0.0
      %317 = vmatprep.subr.mxu0 0.0
      %318 = vmatpush1.msra.mxu0 0.0
      %319 = vmatprep.subr.mxu0 0.0
      %320 = vmatpush1.msra.mxu0 0.0
      %321 = vmatprep.subr.mxu0 0.0
      %322 = vmatpush1.msra.mxu0 0.0
      %323 = vmatprep.subr.mxu0 0.0
      %324 = vmatpush1.msra.mxu0 0.0
      %325 = vmatprep.subr.mxu0 0.0
      %326 = vmatpush1.msra.mxu0 0.0
      %327 = vmatprep.subr.mxu0 0.0
      %328 = vmatpush1.msra.mxu0 0.0
      %329 = vmatprep.subr.mxu0 0.0
      %330 = vmatpush1.msra.mxu0 0.0
      %331 = vmatprep.subr.mxu0 0.0
      %332 = vmatpush1.msra.mxu0 0.0
      %333 = vmatprep.mubr.f32.mxu0 0.0
      %334 = vmatmul.mubr.f32.gmra.mrb[0].mxu0 %v264
      %v335 = vpop.f32.mrb[0].mxu0
      %v336 = vadd.f32 0.0, %v335
      %v337 = vpop.f32.mrb[0].mxu0
      %v338 = vadd.f32 0.0, %v337
      %339 = vmatprep.mubr.f32.mxu0 0.0
      %340 = vmatmul.mubr.f32.gmra.mrb[0].mxu0 %v267
      %v341 = vpop.f32.mrb[0].mxu0
      %v342 = vadd.f32 0.0, %v341
      %v343 = vpop.f32.mrb[0].mxu0
      %v344 = vadd.f32 0.0, %v343
      %345 = vdwg.mxu0
      %346 = vmatprep.subr.mxu0 %v253
      %347 = vmatpush1.msra.mxu0 %v252
      %348 = vmatprep.subr.mxu0 %v257
      %349 = vmatpush1.msra.mxu0 %v256
      %350 = vmatprep.subr.mxu0 0.0
      %351 = vmatpush1.msra.mxu0 0.0
      %352 = vmatprep.subr.mxu0 0.0
      %353 = vmatpush1.msra.mxu0 0.0
      %354 = vmatprep.subr.mxu0 0.0
      %355 = vmatpush1.msra.mxu0 0.0
      %356 = vmatprep.subr.mxu0 0.0
      %357 = vmatpush1.msra.mxu0 0.0
      %358 = vmatprep.subr.mxu0 0.0
      %359 = vmatpush1.msra.mxu0 0.0
      %360 = vmatprep.subr.mxu0 0.0
      %361 = vmatpush1.msra.mxu0 0.0
      %362 = vmatprep.subr.mxu0 0.0
      %363 = vmatpush1.msra.mxu0 0.0
      %364 = vmatprep.subr.mxu0 0.0
      %365 = vmatpush1.msra.mxu0 0.0
      %366 = vmatprep.subr.mxu0 0.0
      %367 = vmatpush1.msra.mxu0 0.0
      %368 = vmatprep.subr.mxu0 0.0
      %369 = vmatpush1.msra.mxu0 0.0
      %370 = vmatprep.subr.mxu0 0.0
      %371 = vmatpush1.msra.mxu0 0.0
      %372 = vmatprep.subr.mxu0 0.0
      %373 = vmatpush1.msra.mxu0 0.0
      %374 = vmatprep.subr.mxu0 0.0
      %375 = vmatpush1.msra.mxu0 0.0
      %376 = vmatprep.subr.mxu0 0.0
      %377 = vmatpush1.msra.mxu0 0.0
      %378 = vmatprep.subr.mxu0 0.0
      %379 = vmatpush1.msra.mxu0 0.0
      %380 = vmatprep.subr.mxu0 0.0
      %381 = vmatpush1.msra.mxu0 0.0
      %382 = vmatprep.subr.mxu0 0.0
      %383 = vmatpush1.msra.mxu0 0.0
      %384 = vmatprep.subr.mxu0 0.0
      %385 = vmatpush1.msra.mxu0 0.0
      %386 = vmatprep.subr.mxu0 0.0
      %387 = vmatpush1.msra.mxu0 0.0
      %388 = vmatprep.subr.mxu0 0.0
      %389 = vmatpush1.msra.mxu0 0.0
      %390 = vmatprep.subr.mxu0 0.0
      %391 = vmatpush1.msra.mxu0 0.0
      %392 = vmatprep.subr.mxu0 0.0
      %393 = vmatpush1.msra.mxu0 0.0
      %394 = vmatprep.subr.mxu0 0.0
      %395 = vmatpush1.msra.mxu0 0.0
      %396 = vmatprep.subr.mxu0 0.0
      %397 = vmatpush1.msra.mxu0 0.0
      %398 = vmatprep.subr.mxu0 0.0
      %399 = vmatpush1.msra.mxu0 0.0
      %400 = vmatprep.subr.mxu0 0.0
      %401 = vmatpush1.msra.mxu0 0.0
      %402 = vmatprep.subr.mxu0 0.0
      %403 = vmatpush1.msra.mxu0 0.0
      %404 = vmatprep.subr.mxu0 0.0
      %405 = vmatpush1.msra.mxu0 0.0
      %406 = vmatprep.subr.mxu0 0.0
      %407 = vmatpush1.msra.mxu0 0.0
      %408 = vmatprep.subr.mxu0 0.0
      %409 = vmatpush1.msra.mxu0 0.0
      %410 = vmatprep.mubr.f32.mxu0 0.0
      %411 = vmatmul.mubr.f32.gmra.mrb[0].mxu0 %v264
      %v412 = vpop.f32.mrb[0].mxu0
      %v413 = vadd.f32 0.0, %v412
      %v414 = vpop.f32.mrb[0].mxu0
      %v415 = vadd.f32 0.0, %v414
      %416 = vmatprep.mubr.f32.mxu0 0.0
      %417 = vmatmul.mubr.f32.gmra.mrb[0].mxu0 %v267
      %v418 = vpop.f32.mrb[0].mxu0
      %v419 = vadd.f32 0.0, %v418
      %v420 = vpop.f32.mrb[0].mxu0
      %v421 = vadd.f32 0.0, %v420
      %422 = vdwg.mxu0
      %v423 = vadd.f32 %v250, %v336
      %v424 = vadd.f32 %v251, %v338
      %v425 = vadd.f32 %v252, %v413
      %v426 = vadd.f32 %v253, %v415
      %v427 = vadd.f32 %v254, %v342
      %v428 = vadd.f32 %v255, %v344
      %v429 = vadd.f32 %v256, %v419
      %v430 = vadd.f32 %v257, %v421
      %432 = vset.pattern.permute.xlu0 0
      %433 = vperm.xlu0 %432, %v260
      %v434 = vpop.permute.xlu0 %433
      %437 = vset.pattern.permute.xlu0 0
      %438 = vperm.xlu0 %437, %v261
      %v439 = vpop.permute.xlu0 %438
      %v441 = vadd.f32 %v423, %v434
      %v442 = vadd.f32 %v424, %v434
      %v443 = vadd.f32 %v425, %v434
      %v444 = vadd.f32 %v426, %v434
      %v445 = vadd.f32 %v427, %v439
      %v446 = vadd.f32 %v428, %v439
      %v447 = vadd.f32 %v429, %v439
      %v448 = vadd.f32 %v430, %v439
      %449 = vst [vmem:[%s248] sm:$0xff] %v441
      %450 = vst [vmem:[%s248 + $0x8] sm:$0xff] %v442
      %451 = vst [vmem:[%s248 + $0x10] sm:$0xff] %v443
      %452 = vst [vmem:[%s248 + $0x18] sm:$0xff] %v444
      %453 = vst [vmem:[%s248 + $0x20] sm:$0xff] %v445
      %454 = vst [vmem:[%s248 + $0x28] sm:$0xff] %v446
      %455 = vst [vmem:[%s248 + $0x30] sm:$0xff] %v447
      %456 = vst [vmem:[%s248 + $0x38] sm:$0xff] %v448
      %s457 = smul.u32 4, %s19
      %p458 = scmp.lt.s32.totalorder %s18, 1
      %s459 = scalar_select %p458, %s18, 1
      %p460 = scmp.lt.s32.totalorder %s457, 3
      %s461 = scalar_select %p460, %s457, 3
      %s462 = smul.addr %s459, 8
      %s463 = sadd.s32 %s461, %s462
      %s464 = smul.addr %s463, 8
      %s465 = scalar_lea.vmem %s3, %s464
      // Predicated region
      $region33: #{moe_layer3d_forward.1} parent=31 // pred_check
        %p466 = pneg %p126
      $region34: #{moe_layer3d_forward.1} parent=31 // pred_check_branch
        %468 = sbr.rel (%p466) target = $region36
      $region35: #{moe_layer3d_forward.1} parent=31 // pred_region
        %s469 = smul.u32 4, %s19
      $region36: #{moe_layer3d_forward.1} parent=31 // pred_fallthru
        _
    $region32: #{moe_layer3d_forward.1} parent=5 // pred_fallthru
      _
    %p470 = scmp.le.s32.totalorder 2, %s9
    // Predicated region
    $region37: #{moe_layer3d_forward.1} parent=5 // pred_check
      %p471 = pneg %p470
    $region38: #{moe_layer3d_forward.1} parent=5 // pred_check_branch
      %473 = sbr.rel (%p471) target = $region40
    $region39: #{moe_layer3d_forward.1} parent=5 // pred_region
      %s474 = ssub.s32 %s9, 2
      // Predicated region
      $region41: #{moe_layer3d_forward.1} parent=39 // pred_check
        %p475 = pneg %p132
      $region42: #{moe_layer3d_forward.1} parent=39 // pred_check_branch
        %477 = sbr.rel (%p475) target = $region44
      $region43: #{moe_layer3d_forward.1} parent=39 // pred_region
        %s478 = smul.u32 4, %s21
        %p479 = scmp.lt.s32.totalorder %s20, 1
        %s480 = scalar_select %p479, %s20, 1
        %p481 = scmp.lt.s32.totalorder %s478, 3
        %s482 = scalar_select %p481, %s478, 3
        %s483 = smul.addr %s480, 8
        %s484 = sadd.s32 %s482, %s483
        %s485 = smul.addr %s484, 8
        %s486 = scalar_lea.vmem %s3, %s485
      $region44: #{moe_layer3d_forward.1} parent=39 // pred_fallthru
        _
    $region40: #{moe_layer3d_forward.1} parent=5 // pred_fallthru
      _
  $region6: #{moe_layer3d_forward.1} parent=0 // loop_footer
    %s13 = sadd.s32 1, %s9
  $region7: #{moe_layer3d_forward.1} parent=0 // loop_footer_branch
    %8 = sbr.rel target = $region3
  $region8: #{moe_layer3d_forward.1} parent=0 // loop_exit
    _

</llo_original>
